<compile_context>
chip_gen: v6e
topology: v6e:2x2x1
jax: 0.10.0
libtpu: 0.0.40
codegen_flags: <defaults>
</compile_context>

<pallas_src>
import jax
import jax.numpy as jnp
from jax.experimental import pallas as pl
from jax.experimental.pallas import tpu as pltpu


def qtran_v_kernel(state_ref, hidden_ref,
                   we1_ref, be1_ref, we2_ref, be2_ref,
                   wv1s_ref, wv1h_ref, bv1_ref,
                   wv2_ref, bv2_ref, wv3_ref, bv3_ref,
                   out_ref):
    # ---- stacked per-agent encoder (2 MXU pushes for all agents) ------------
    # hidden_ref: (TB, A*H); we1_ref: block-diagonal (A*H, A*H); be1_ref tiled.
    z1 = jnp.maximum(
        jnp.dot(hidden_ref[...], we1_ref[...], preferred_element_type=jnp.float32)
        + be1_ref[...], 0.0)
    # we2_ref is we2 stacked A times along rows -> this matmul also performs
    # the agent sum.  be2_ref was pre-scaled by A in the wrapper.
    he_sum = (jnp.dot(z1, we2_ref[...], preferred_element_type=jnp.float32)
              + be2_ref[...])                                   # (TB, H)

    # ---- v MLP on concat([state, he_sum]) (concat folded into split wv1) ----
    v1 = jnp.maximum(
        jnp.dot(state_ref[...], wv1s_ref[...], preferred_element_type=jnp.float32)
        + jnp.dot(he_sum, wv1h_ref[...], preferred_element_type=jnp.float32)
        + bv1_ref[...], 0.0)
    v2 = jnp.maximum(
        jnp.dot(v1, wv2_ref[...], preferred_element_type=jnp.float32)
        + bv2_ref[...], 0.0)

    # ---- final (Q, 1) layer on the VPU/XLU, not the MXU ----------------------
    # wv3_ref is passed as a (1, Q) row; multiply + lane-reduce.
    v = jnp.sum(v2 * wv3_ref[...], axis=-1, keepdims=True) + bv3_ref[...]
    out_ref[...] = v.astype(out_ref.dtype)


def qtran_v_forward(state, hidden, params, *, block_b=512):
    """state: (E, T, S)  hidden: (E, T, A, H)  -> v: (E*T, 1)"""
    E, T, A, H = hidden.shape
    B = E * T
    S = state.shape[-1]
    AH = A * H

    f32 = jnp.float32
    state2d = state.reshape(B, S).astype(f32)
    # Contiguous reshape only -- no transpose, no extra HBM pass.
    hidden2d = hidden.reshape(B, AH).astype(f32)

    # Fold the per-agent encoder into two stacked weights (tiny, done in XLA):
    we1_bd = jnp.kron(jnp.eye(A, dtype=f32), params["we1"].astype(f32))  # (AH, AH)
    be1_t = jnp.tile(params["be1"].astype(f32), (1, A))                  # (1, AH)
    we2_st = jnp.tile(params["we2"].astype(f32), (A, 1))                 # (AH, H)
    be2_s = params["be2"].astype(f32) * A                                # (1, H)
    wv3_row = params["wv3"].astype(f32).reshape(1, -1)                   # (1, Q)

    # ---- batch tiling ---------------------------------------------------------
    if B <= block_b:
        tb = B                       # single block == full array dims
    else:
        tb = block_b                 # multiple of 8 by construction
    nb = pl.cdiv(B, tb)
    Bp = nb * tb
    if Bp != B:
        state2d = jnp.pad(state2d, ((0, Bp - B), (0, 0)))
        hidden2d = jnp.pad(hidden2d, ((0, Bp - B), (0, 0)))

    def tiled(shape):
        return pl.BlockSpec(shape, lambda i: (i, 0))

    def resident(x):
        return pl.BlockSpec(x.shape, lambda i: (0, 0))

    weights = (we1_bd, be1_t, we2_st, be2_s,
               params["wv1s"].astype(f32), params["wv1h"].astype(f32),
               params["bv1"].astype(f32),
               params["wv2"].astype(f32), params["bv2"].astype(f32),
               wv3_row, params["bv3"].astype(f32))

    out = pl.pallas_call(
        qtran_v_kernel,
        out_shape=jax.ShapeDtypeStruct((Bp, 1), jnp.float32),
        grid=(nb,),
        in_specs=[tiled((tb, S)), tiled((tb, AH))] + [resident(w) for w in weights],
        out_specs=tiled((tb, 1)),
        compiler_params=pltpu.CompilerParams(
            dimension_semantics=("parallel",),
            vmem_limit_bytes=32 * 1024 * 1024),
    )(state2d, hidden2d, *weights)

    return out[:B] if Bp != B else out


def make_params(key, S, H, Q):
    """Deterministic synthetic parameters (weights stored as (in, out))."""
    ks = jax.random.split(key, 10)

    def w(k, shape):
        return jax.random.normal(k, shape, dtype=jnp.float32) * 0.1

    return {
        "we1": w(ks[0], (H, H)), "be1": w(ks[1], (1, H)),
        "we2": w(ks[2], (H, H)), "be2": w(ks[3], (1, H)),
        # first v layer weight split: rows [0:S) act on state, [S:S+H) on he_sum
        "wv1s": w(ks[4], (S, Q)), "wv1h": w(ks[5], (H, Q)), "bv1": w(ks[6], (1, Q)),
        "wv2": w(ks[7], (Q, Q)), "bv2": w(ks[8], (1, Q)),
        "wv3": w(ks[9], (Q, 1)), "bv3": jnp.zeros((1, 1), jnp.float32),
    }


def qtran_v_reference(state, hidden, params):
    """Pure-JAX reference mirroring the PyTorch forward."""
    E, T, A, H = hidden.shape
    B = E * T
    st = state.reshape(B, -1).astype(jnp.float32)
    h = hidden.reshape(-1, H).astype(jnp.float32)
    he = jnp.maximum(h @ params["we1"] + params["be1"], 0.0) @ params["we2"] + params["be2"]
    he = he.reshape(B, A, H).sum(axis=-2)
    wv1 = jnp.concatenate([params["wv1s"], params["wv1h"]], axis=0)
    inputs = jnp.concatenate([st, he], axis=-1)
    v1 = jnp.maximum(inputs @ wv1 + params["bv1"], 0.0)
    v2 = jnp.maximum(v1 @ params["wv2"] + params["bv2"], 0.0)
    return v2 @ params["wv3"] + params["bv3"]


if __name__ == "__main__":
    # Small shapes consistent with the module's forward:
    #   episode_num=2, max_episode_len=8, n_agents=4,
    #   rnn_hidden_dim=32, state_shape=24, qtran_hidden_dim=64
    E, T, A = 2, 8, 4
    H, S, Q = 32, 24, 64

    key = jax.random.PRNGKey(0)
    k_state, k_hidden, k_params = jax.random.split(key, 3)
    state = jax.random.normal(k_state, (E, T, S), dtype=jnp.float32)
    hidden = jax.random.normal(k_hidden, (E, T, A, H), dtype=jnp.float32)
    params = make_params(k_params, S, H, Q)

    v_ref = qtran_v_reference(state, hidden, params)

    # Single-block path (B <= block_b).
    v = qtran_v_forward(state, hidden, params)
    v = jax.block_until_ready(v)
    assert v.shape == (E * T, 1), v.shape
    assert jnp.allclose(v, v_ref, atol=1e-4, rtol=1e-4), (
        float(jnp.max(jnp.abs(v - v_ref))))

    # Gridded path (forces a batch grid > 1 with resident weights).
    v_g = qtran_v_forward(state, hidden, params, block_b=8)
    v_g = jax.block_until_ready(v_g)
    assert v_g.shape == (E * T, 1), v_g.shape
    assert jnp.allclose(v_g, v_ref, atol=1e-4, rtol=1e-4), (
        float(jnp.max(jnp.abs(v_g - v_ref))))

    print("KERNEL_OK")
</pallas_src>

<mosaic_0001>
module attributes {stable_mosaic.version = 11 : i64} {
  func.func @qtran_v_kernel(%arg0: i32, %arg1: memref<16x24xf32, #tpu.memory_space<vmem>>, %arg2: memref<16x128xf32, #tpu.memory_space<vmem>>, %arg3: memref<128x128xf32, #tpu.memory_space<vmem>>, %arg4: memref<1x128xf32, #tpu.memory_space<vmem>>, %arg5: memref<128x32xf32, #tpu.memory_space<vmem>>, %arg6: memref<1x32xf32, #tpu.memory_space<vmem>>, %arg7: memref<24x64xf32, #tpu.memory_space<vmem>>, %arg8: memref<32x64xf32, #tpu.memory_space<vmem>>, %arg9: memref<1x64xf32, #tpu.memory_space<vmem>>, %arg10: memref<64x64xf32, #tpu.memory_space<vmem>>, %arg11: memref<1x64xf32, #tpu.memory_space<vmem>>, %arg12: memref<1x64xf32, #tpu.memory_space<vmem>>, %arg13: memref<1x1xf32, #tpu.memory_space<vmem>>, %arg14: memref<16x1xf32, #tpu.memory_space<vmem>>) attributes {dimension_semantics = [#tpu.dimension_semantics<parallel>], iteration_bounds = array<i64: 1>, scalar_prefetch = 0 : i64, scratch_operands = 0 : i64, tpu.core_type = #tpu.core_type<tc>, window_params = [{transform_indices = @transform_0, window_bounds = array<i64: 16, 24>}, {transform_indices = @transform_1, window_bounds = array<i64: 16, 128>}, {pipeline_mode = #tpu.pipeline_mode<synchronous>, transform_indices = @transform_2, window_bounds = array<i64: 128, 128>}, {pipeline_mode = #tpu.pipeline_mode<synchronous>, transform_indices = @transform_3, window_bounds = array<i64: 1, 128>}, {pipeline_mode = #tpu.pipeline_mode<synchronous>, transform_indices = @transform_4, window_bounds = array<i64: 128, 32>}, {pipeline_mode = #tpu.pipeline_mode<synchronous>, transform_indices = @transform_5, window_bounds = array<i64: 1, 32>}, {pipeline_mode = #tpu.pipeline_mode<synchronous>, transform_indices = @transform_6, window_bounds = array<i64: 24, 64>}, {pipeline_mode = #tpu.pipeline_mode<synchronous>, transform_indices = @transform_7, window_bounds = array<i64: 32, 64>}, {pipeline_mode = #tpu.pipeline_mode<synchronous>, transform_indices = @transform_8, window_bounds = array<i64: 1, 64>}, {pipeline_mode = #tpu.pipeline_mode<synchronous>, transform_indices = @transform_9, window_bounds = array<i64: 64, 64>}, {pipeline_mode = #tpu.pipeline_mode<synchronous>, transform_indices = @transform_10, window_bounds = array<i64: 1, 64>}, {pipeline_mode = #tpu.pipeline_mode<synchronous>, transform_indices = @transform_11, window_bounds = array<i64: 1, 64>}, {pipeline_mode = #tpu.pipeline_mode<synchronous>, transform_indices = @transform_12, window_bounds = array<i64: 1, 1>}, {transform_indices = @transform_13, window_bounds = array<i64: 16, 1>}]} {
    %c0 = arith.constant 0 : index
    %c0_0 = arith.constant 0 : index
    %0 = vector.load %arg2[%c0, %c0_0] : memref<16x128xf32, #tpu.memory_space<vmem>>, vector<16x128xf32>
    %c0_1 = arith.constant 0 : index
    %c0_2 = arith.constant 0 : index
    %1 = vector.load %arg3[%c0_1, %c0_2] : memref<128x128xf32, #tpu.memory_space<vmem>>, vector<128x128xf32>
    %cst = arith.constant dense<0.000000e+00> : vector<16x128xf32>
    %2 = tpu.matmul %0, %1, %cst {dimension_numbers = #tpu.dot_dimension_numbers<[1], [0], [0], [1], [0, 0, 1, 1], [], []>} : vector<16x128xf32>, vector<128x128xf32>, vector<16x128xf32> -> vector<16x128xf32>
    %c0_3 = arith.constant 0 : index
    %c0_4 = arith.constant 0 : index
    %3 = vector.load %arg4[%c0_3, %c0_4] : memref<1x128xf32, #tpu.memory_space<vmem>>, vector<1x128xf32>
    %4 = vector.broadcast %3 : vector<1x128xf32> to vector<16x128xf32>
    %5 = arith.addf %2, %4 : vector<16x128xf32>
    %cst_5 = arith.constant 0.000000e+00 : f32
    %6 = vector.broadcast %cst_5 : f32 to vector<16x128xf32>
    %7 = arith.maximumf %5, %6 : vector<16x128xf32>
    %c0_6 = arith.constant 0 : index
    %c0_7 = arith.constant 0 : index
    %8 = vector.load %arg5[%c0_6, %c0_7] : memref<128x32xf32, #tpu.memory_space<vmem>>, vector<128x32xf32>
    %cst_8 = arith.constant dense<0.000000e+00> : vector<16x32xf32>
    %9 = tpu.matmul %7, %8, %cst_8 {dimension_numbers = #tpu.dot_dimension_numbers<[1], [0], [0], [1], [0, 0, 1, 1], [], []>} : vector<16x128xf32>, vector<128x32xf32>, vector<16x32xf32> -> vector<16x32xf32>
    %c0_9 = arith.constant 0 : index
    %c0_10 = arith.constant 0 : index
    %10 = vector.load %arg6[%c0_9, %c0_10] : memref<1x32xf32, #tpu.memory_space<vmem>>, vector<1x32xf32>
    %11 = vector.broadcast %10 : vector<1x32xf32> to vector<16x32xf32>
    %12 = arith.addf %9, %11 : vector<16x32xf32>
    %c0_11 = arith.constant 0 : index
    %c0_12 = arith.constant 0 : index
    %13 = vector.load %arg1[%c0_11, %c0_12] : memref<16x24xf32, #tpu.memory_space<vmem>>, vector<16x24xf32>
    %c0_13 = arith.constant 0 : index
    %c0_14 = arith.constant 0 : index
    %14 = vector.load %arg7[%c0_13, %c0_14] : memref<24x64xf32, #tpu.memory_space<vmem>>, vector<24x64xf32>
    %cst_15 = arith.constant dense<0.000000e+00> : vector<16x64xf32>
    %15 = tpu.matmul %13, %14, %cst_15 {dimension_numbers = #tpu.dot_dimension_numbers<[1], [0], [0], [1], [0, 0, 1, 1], [], []>} : vector<16x24xf32>, vector<24x64xf32>, vector<16x64xf32> -> vector<16x64xf32>
    %c0_16 = arith.constant 0 : index
    %c0_17 = arith.constant 0 : index
    %16 = vector.load %arg8[%c0_16, %c0_17] : memref<32x64xf32, #tpu.memory_space<vmem>>, vector<32x64xf32>
    %cst_18 = arith.constant dense<0.000000e+00> : vector<16x64xf32>
    %17 = tpu.matmul %12, %16, %cst_18 {dimension_numbers = #tpu.dot_dimension_numbers<[1], [0], [0], [1], [0, 0, 1, 1], [], []>} : vector<16x32xf32>, vector<32x64xf32>, vector<16x64xf32> -> vector<16x64xf32>
    %18 = arith.addf %15, %17 : vector<16x64xf32>
    %c0_19 = arith.constant 0 : index
    %c0_20 = arith.constant 0 : index
    %19 = vector.load %arg9[%c0_19, %c0_20] : memref<1x64xf32, #tpu.memory_space<vmem>>, vector<1x64xf32>
    %20 = vector.broadcast %19 : vector<1x64xf32> to vector<16x64xf32>
    %21 = arith.addf %18, %20 : vector<16x64xf32>
    %cst_21 = arith.constant 0.000000e+00 : f32
    %22 = vector.broadcast %cst_21 : f32 to vector<16x64xf32>
    %23 = arith.maximumf %21, %22 : vector<16x64xf32>
    %c0_22 = arith.constant 0 : index
    %c0_23 = arith.constant 0 : index
    %24 = vector.load %arg10[%c0_22, %c0_23] : memref<64x64xf32, #tpu.memory_space<vmem>>, vector<64x64xf32>
    %cst_24 = arith.constant dense<0.000000e+00> : vector<16x64xf32>
    %25 = tpu.matmul %23, %24, %cst_24 {dimension_numbers = #tpu.dot_dimension_numbers<[1], [0], [0], [1], [0, 0, 1, 1], [], []>} : vector<16x64xf32>, vector<64x64xf32>, vector<16x64xf32> -> vector<16x64xf32>
    %c0_25 = arith.constant 0 : index
    %c0_26 = arith.constant 0 : index
    %26 = vector.load %arg11[%c0_25, %c0_26] : memref<1x64xf32, #tpu.memory_space<vmem>>, vector<1x64xf32>
    %27 = vector.broadcast %26 : vector<1x64xf32> to vector<16x64xf32>
    %28 = arith.addf %25, %27 : vector<16x64xf32>
    %cst_27 = arith.constant 0.000000e+00 : f32
    %29 = vector.broadcast %cst_27 : f32 to vector<16x64xf32>
    %30 = arith.maximumf %28, %29 : vector<16x64xf32>
    %c0_28 = arith.constant 0 : index
    %c0_29 = arith.constant 0 : index
    %31 = vector.load %arg12[%c0_28, %c0_29] : memref<1x64xf32, #tpu.memory_space<vmem>>, vector<1x64xf32>
    %32 = vector.broadcast %31 : vector<1x64xf32> to vector<16x64xf32>
    %33 = arith.mulf %30, %32 : vector<16x64xf32>
    %cst_30 = arith.constant dense<0.000000e+00> : vector<16xf32>
    %34 = vector.multi_reduction <add>, %33, %cst_30 [1] : vector<16x64xf32> to vector<16xf32>
    %35 = vector.shape_cast %34 : vector<16xf32> to vector<16x1xf32>
    %c0_31 = arith.constant 0 : index
    %c0_32 = arith.constant 0 : index
    %36 = vector.load %arg13[%c0_31, %c0_32] : memref<1x1xf32, #tpu.memory_space<vmem>>, vector<1x1xf32>
    %37 = vector.broadcast %36 : vector<1x1xf32> to vector<16x1xf32>
    %38 = arith.addf %35, %37 : vector<16x1xf32>
    %c0_33 = arith.constant 0 : index
    %c0_34 = arith.constant 0 : index
    %39 = vector.load %arg14[%c0_33, %c0_34] : memref<16x1xf32, #tpu.memory_space<vmem>>, vector<16x1xf32>
    tpu.vector_store %arg14[%c0_33, %c0_34], %38 {strides = array<i32>} : memref<16x1xf32, #tpu.memory_space<vmem>>, vector<16x1xf32>,
    return
  }
  func.func @transform_0(%arg0: i32) -> (i32, i32) {
    %c0_i32 = arith.constant 0 : i32
    %c0_i32_0 = arith.constant 0 : i32
    return %arg0, %c0_i32 : i32, i32
  }
  func.func @transform_1(%arg0: i32) -> (i32, i32) {
    %c0_i32 = arith.constant 0 : i32
    %c0_i32_0 = arith.constant 0 : i32
    return %arg0, %c0_i32 : i32, i32
  }
  func.func @transform_2(%arg0: i32) -> (i32, i32) {
    %c0_i32 = arith.constant 0 : i32
    %c0_i32_0 = arith.constant 0 : i32
    %c0_i32_1 = arith.constant 0 : i32
    return %c0_i32, %c0_i32_0 : i32, i32
  }
  func.func @transform_3(%arg0: i32) -> (i32, i32) {
    %c0_i32 = arith.constant 0 : i32
    %c0_i32_0 = arith.constant 0 : i32
    %c0_i32_1 = arith.constant 0 : i32
    return %c0_i32, %c0_i32_0 : i32, i32
  }
  func.func @transform_4(%arg0: i32) -> (i32, i32) {
    %c0_i32 = arith.constant 0 : i32
    %c0_i32_0 = arith.constant 0 : i32
    %c0_i32_1 = arith.constant 0 : i32
    return %c0_i32, %c0_i32_0 : i32, i32
  }
  func.func @transform_5(%arg0: i32) -> (i32, i32) {
    %c0_i32 = arith.constant 0 : i32
    %c0_i32_0 = arith.constant 0 : i32
    %c0_i32_1 = arith.constant 0 : i32
    return %c0_i32, %c0_i32_0 : i32, i32
  }
  func.func @transform_6(%arg0: i32) -> (i32, i32) {
    %c0_i32 = arith.constant 0 : i32
    %c0_i32_0 = arith.constant 0 : i32
    %c0_i32_1 = arith.constant 0 : i32
    return %c0_i32, %c0_i32_0 : i32, i32
  }
  func.func @transform_7(%arg0: i32) -> (i32, i32) {
    %c0_i32 = arith.constant 0 : i32
    %c0_i32_0 = arith.constant 0 : i32
    %c0_i32_1 = arith.constant 0 : i32
    return %c0_i32, %c0_i32_0 : i32, i32
  }
  func.func @transform_8(%arg0: i32) -> (i32, i32) {
    %c0_i32 = arith.constant 0 : i32
    %c0_i32_0 = arith.constant 0 : i32
    %c0_i32_1 = arith.constant 0 : i32
    return %c0_i32, %c0_i32_0 : i32, i32
  }
  func.func @transform_9(%arg0: i32) -> (i32, i32) {
    %c0_i32 = arith.constant 0 : i32
    %c0_i32_0 = arith.constant 0 : i32
    %c0_i32_1 = arith.constant 0 : i32
    return %c0_i32, %c0_i32_0 : i32, i32
  }
  func.func @transform_10(%arg0: i32) -> (i32, i32) {
    %c0_i32 = arith.constant 0 : i32
    %c0_i32_0 = arith.constant 0 : i32
    %c0_i32_1 = arith.constant 0 : i32
    return %c0_i32, %c0_i32_0 : i32, i32
  }
  func.func @transform_11(%arg0: i32) -> (i32, i32) {
    %c0_i32 = arith.constant 0 : i32
    %c0_i32_0 = arith.constant 0 : i32
    %c0_i32_1 = arith.constant 0 : i32
    return %c0_i32, %c0_i32_0 : i32, i32
  }
  func.func @transform_12(%arg0: i32) -> (i32, i32) {
    %c0_i32 = arith.constant 0 : i32
    %c0_i32_0 = arith.constant 0 : i32
    %c0_i32_1 = arith.constant 0 : i32
    return %c0_i32, %c0_i32_0 : i32, i32
  }
  func.func @transform_13(%arg0: i32) -> (i32, i32) {
    %c0_i32 = arith.constant 0 : i32
    %c0_i32_0 = arith.constant 0 : i32
    return %arg0, %c0_i32 : i32, i32
  }
}

</mosaic_0001>

<llo_original>
// kernel: tpu_custom_call.1
$region0: #{tpu_custom_call.1}
  #allocation0 [shape = 'u32[]', space=smem, size = 0x4, offset = 0x4, fixed_abs, tag = 'smem constant byte address 0x4 - core index']
  #allocation1 [shape = 'u32[144,128]{1,0:T(1,128)}', space=vmem, size = 0x12000, scoped, tag = 'internal scratch']
  #allocation2 [shape = 'f32[1,1]{1,0:T(1,128)S(1)}', space=vmem, size = 0x200, scoped, tag = 'scoped memory for tpu_custom_call.1']
  %s0 = inlined_call_operand.hbm [shape: f32[16,24], index: 0, kind: input, shape index: {}]
  %s1 = inlined_call_operand.hbm [shape: f32[16,128], index: 1, kind: input, shape index: {}]
  %s2 = inlined_call_operand.vmem [shape: f32[128,128], index: 2, kind: input, shape index: {}]
  %s3 = inlined_call_operand.vmem [shape: f32[1,128], index: 3, kind: input, shape index: {}]
  %s4 = inlined_call_operand.vmem [shape: f32[128,32], index: 4, kind: input, shape index: {}]
  %s5 = inlined_call_operand.vmem [shape: f32[1,32], index: 5, kind: input, shape index: {}]
  %s6 = inlined_call_operand.hbm [shape: f32[24,64], index: 6, kind: input, shape index: {}]
  %s7 = inlined_call_operand.vmem [shape: f32[32,64], index: 7, kind: input, shape index: {}]
  %s8 = inlined_call_operand.vmem [shape: f32[1,64], index: 8, kind: input, shape index: {}]
  %s9 = inlined_call_operand.hbm [shape: f32[64,64], index: 9, kind: input, shape index: {}]
  %s10 = inlined_call_operand.vmem [shape: f32[1,64], index: 10, kind: input, shape index: {}]
  %s11 = inlined_call_operand.vmem [shape: f32[1,64], index: 11, kind: input, shape index: {}]
  %s12 = inlined_call_operand.<no memory space> [shape: f32[1,1], index: 12, kind: input, shape index: {}]
  %s13 = inlined_call_operand.vmem [shape: f32[16,1], index: 13, kind: output, shape index: {}]
  %s14 = sld [smem:[#allocation0]]
  $region78: #{tpu_custom_call.1} parent=0
    _
  %s16 = ssub.s32 1, %s14
  %s17 = scalar_select 0, %s16, %s14
  %v18 = vstv %s12
  %19 = vst [vmem:[#allocation2] sm:$0x1] %v18
  $region1: #{tpu_custom_call.1} parent=0
    #allocation3 [shape = 'u8[8192]{0}', space=vmem, size = 0x2000, scoped, tag = 'input window, operand 0, single buffered']
    #allocation4 [shape = 's32[1]{0}', space=sflag, size = 0x4, scoped, tag = 'scoped memory for tpu_custom_call.1']
    #allocation5 [shape = 'u8[8192]{0}', space=vmem, size = 0x2000, scoped, tag = 'input window, operand 1, single buffered']
    #allocation6 [shape = 's32[1]{0}', space=sflag, size = 0x4, scoped, tag = 'scoped memory for tpu_custom_call.1']
    #allocation7 [shape = 'u8[12288]{0}', space=vmem, size = 0x3000, scoped, tag = 'input window, operand 6, single buffered']
    #allocation8 [shape = 'u8[32768]{0}', space=vmem, size = 0x8000, scoped, tag = 'input window, operand 9, single buffered']
    #allocation9 [shape = 's32[1]{0}', space=sflag, size = 0x4, scoped, tag = 'scoped memory for tpu_custom_call.1']
    %20 = vsyncpa [#allocation4], 0
    %21 = vsyncpa [#allocation6], 0
    %22 = vsyncpa [#allocation9], 0
    // Predicated region
    $region2: #{tpu_custom_call.1} parent=1 // pred_check
      _
    $region3: #{tpu_custom_call.1} parent=1 // pred_check_branch
      %24 = sbr.rel (0) target = $region5
    $region4: #{tpu_custom_call.1} parent=1 // pred_region
      %s26 = ssub.s32 256, 256
      %27 = vsyncadd [#allocation4], %s26
      %s28 = sshll.u32 [#allocation3], 4
      %s29 = int_to_ptr.vmem [resolvable:$true] %s28
      %34 = dma.hbm_to_vmem [thread:$0]  %s0, 256, %s29, [#allocation4], 128, 128, 8
    $region5: #{tpu_custom_call.1} parent=1 // pred_fallthru
      _
    // Predicated region
    $region6: #{tpu_custom_call.1} parent=1 // pred_check
      _
    $region7: #{tpu_custom_call.1} parent=1 // pred_check_branch
      %36 = sbr.rel (0) target = $region9
    $region8: #{tpu_custom_call.1} parent=1 // pred_region
      %s38 = ssub.s32 256, 256
      %39 = vsyncadd [#allocation6], %s38
      %s40 = sshll.u32 [#allocation5], 4
      %s41 = int_to_ptr.vmem [resolvable:$true] %s40
      %46 = dma.hbm_to_vmem [thread:$0]  %s1, 256, %s41, [#allocation6], 128, 128, 8
    $region9: #{tpu_custom_call.1} parent=1 // pred_fallthru
      _
    // Predicated region
    $region10: #{tpu_custom_call.1} parent=1 // pred_check
      _
    $region11: #{tpu_custom_call.1} parent=1 // pred_check_branch
      %48 = sbr.rel (0) target = $region13
    $region12: #{tpu_custom_call.1} parent=1 // pred_region
      _
    $region13: #{tpu_custom_call.1} parent=1 // pred_fallthru
      _
    // Predicated region
    $region14: #{tpu_custom_call.1} parent=1 // pred_check
      _
    $region15: #{tpu_custom_call.1} parent=1 // pred_check_branch
      %50 = sbr.rel (0) target = $region17
    $region16: #{tpu_custom_call.1} parent=1 // pred_region
      _
    $region17: #{tpu_custom_call.1} parent=1 // pred_fallthru
      _
    // Predicated region
    $region18: #{tpu_custom_call.1} parent=1 // pred_check
      _
    $region19: #{tpu_custom_call.1} parent=1 // pred_check_branch
      %52 = sbr.rel (0) target = $region21
    $region20: #{tpu_custom_call.1} parent=1 // pred_region
      _
    $region21: #{tpu_custom_call.1} parent=1 // pred_fallthru
      _
    // Predicated region
    $region22: #{tpu_custom_call.1} parent=1 // pred_check
      _
    $region23: #{tpu_custom_call.1} parent=1 // pred_check_branch
      %54 = sbr.rel (0) target = $region25
    $region24: #{tpu_custom_call.1} parent=1 // pred_region
      _
    $region25: #{tpu_custom_call.1} parent=1 // pred_fallthru
      _
    // Predicated region
    $region26: #{tpu_custom_call.1} parent=1 // pred_check
      _
    $region27: #{tpu_custom_call.1} parent=1 // pred_check_branch
      %56 = sbr.rel (0) target = $region29
    $region28: #{tpu_custom_call.1} parent=1 // pred_region
      %s58 = ssub.s32 384, 384
      %59 = vsyncadd [#allocation6], %s58
      %s60 = sshll.u32 [#allocation7], 4
      %s61 = int_to_ptr.vmem [resolvable:$true] %s60
      %66 = dma.hbm_to_vmem [thread:$0]  %s6, 384, %s61, [#allocation6], 128, 128, 8
    $region29: #{tpu_custom_call.1} parent=1 // pred_fallthru
      _
    // Predicated region
    $region30: #{tpu_custom_call.1} parent=1 // pred_check
      _
    $region31: #{tpu_custom_call.1} parent=1 // pred_check_branch
      %68 = sbr.rel (0) target = $region33
    $region32: #{tpu_custom_call.1} parent=1 // pred_region
      _
    $region33: #{tpu_custom_call.1} parent=1 // pred_fallthru
      _
    // Predicated region
    $region34: #{tpu_custom_call.1} parent=1 // pred_check
      _
    $region35: #{tpu_custom_call.1} parent=1 // pred_check_branch
      %70 = sbr.rel (0) target = $region37
    $region36: #{tpu_custom_call.1} parent=1 // pred_region
      _
    $region37: #{tpu_custom_call.1} parent=1 // pred_fallthru
      _
    // Predicated region
    $region38: #{tpu_custom_call.1} parent=1 // pred_check
      _
    $region39: #{tpu_custom_call.1} parent=1 // pred_check_branch
      %72 = sbr.rel (0) target = $region41
    $region40: #{tpu_custom_call.1} parent=1 // pred_region
      %s74 = ssub.s32 1024, 1024
      %75 = vsyncadd [#allocation9], %s74
      %s76 = sshll.u32 [#allocation8], 4
      %s77 = int_to_ptr.vmem [resolvable:$true] %s76
      %82 = dma.hbm_to_vmem [thread:$0]  %s9, 1024, %s77, [#allocation9], 128, 128, 8
    $region41: #{tpu_custom_call.1} parent=1 // pred_fallthru
      _
    // Predicated region
    $region42: #{tpu_custom_call.1} parent=1 // pred_check
      _
    $region43: #{tpu_custom_call.1} parent=1 // pred_check_branch
      %84 = sbr.rel (0) target = $region45
    $region44: #{tpu_custom_call.1} parent=1 // pred_region
      _
    $region45: #{tpu_custom_call.1} parent=1 // pred_fallthru
      _
    // Predicated region
    $region46: #{tpu_custom_call.1} parent=1 // pred_check
      _
    $region47: #{tpu_custom_call.1} parent=1 // pred_check_branch
      %86 = sbr.rel (0) target = $region49
    $region48: #{tpu_custom_call.1} parent=1 // pred_region
      _
    $region49: #{tpu_custom_call.1} parent=1 // pred_fallthru
      _
    // Predicated region
    $region50: #{tpu_custom_call.1} parent=1 // pred_check
      _
    $region51: #{tpu_custom_call.1} parent=1 // pred_check_branch
      %88 = sbr.rel (0) target = $region53
    $region52: #{tpu_custom_call.1} parent=1 // pred_region
      _
    $region53: #{tpu_custom_call.1} parent=1 // pred_fallthru
      _
    // Predicated region
    $region54: #{tpu_custom_call.1} parent=1 // pred_check
      _
    $region55: #{tpu_custom_call.1} parent=1 // pred_check_branch
      %90 = sbr.rel (0) target = $region57
    $region56: #{tpu_custom_call.1} parent=1 // pred_region
      %91 = dma.done [#allocation4], 256
    $region57: #{tpu_custom_call.1} parent=1 // pred_fallthru
      _
    // Predicated region
    $region58: #{tpu_custom_call.1} parent=1 // pred_check
      _
    $region59: #{tpu_custom_call.1} parent=1 // pred_check_branch
      %93 = sbr.rel (0) target = $region61
    $region60: #{tpu_custom_call.1} parent=1 // pred_region
      %94 = dma.done [#allocation6], 256
    $region61: #{tpu_custom_call.1} parent=1 // pred_fallthru
      _
    // Predicated region
    $region62: #{tpu_custom_call.1} parent=1 // pred_check
      _
    $region63: #{tpu_custom_call.1} parent=1 // pred_check_branch
      %96 = sbr.rel (0) target = $region65
    $region64: #{tpu_custom_call.1} parent=1 // pred_region
      %97 = dma.done [#allocation6], 384
    $region65: #{tpu_custom_call.1} parent=1 // pred_fallthru
      _
    // Predicated region
    $region66: #{tpu_custom_call.1} parent=1 // pred_check
      _
    $region67: #{tpu_custom_call.1} parent=1 // pred_check_branch
      %99 = sbr.rel (0) target = $region69
    $region68: #{tpu_custom_call.1} parent=1 // pred_region
      %100 = dma.done [#allocation9], 1024
    $region69: #{tpu_custom_call.1} parent=1 // pred_fallthru
      _
    %v101 = vld [vmem:[#allocation5] sm:$0xff]
    %v102 = vld [vmem:[#allocation5 + $0x8] sm:$0xff]
    %v103 = vld [vmem:[%s2] sm:$0xff]
    %v104 = vld [vmem:[%s2 + $0x8] sm:$0xff]
    %v105 = vld [vmem:[%s2 + $0x10] sm:$0xff]
    %v106 = vld [vmem:[%s2 + $0x18] sm:$0xff]
    %v107 = vld [vmem:[%s2 + $0x20] sm:$0xff]
    %v108 = vld [vmem:[%s2 + $0x28] sm:$0xff]
    %v109 = vld [vmem:[%s2 + $0x30] sm:$0xff]
    %v110 = vld [vmem:[%s2 + $0x38] sm:$0xff]
    %v111 = vld [vmem:[%s2 + $0x40] sm:$0xff]
    %v112 = vld [vmem:[%s2 + $0x48] sm:$0xff]
    %v113 = vld [vmem:[%s2 + $0x50] sm:$0xff]
    %v114 = vld [vmem:[%s2 + $0x58] sm:$0xff]
    %v115 = vld [vmem:[%s2 + $0x60] sm:$0xff]
    %v116 = vld [vmem:[%s2 + $0x68] sm:$0xff]
    %v117 = vld [vmem:[%s2 + $0x70] sm:$0xff]
    %v118 = vld [vmem:[%s2 + $0x78] sm:$0xff]
    %v119 = vld [vmem:[%s3] sm:$0x1]
    %v121 = vlaneseq
    %v122 = vshrl.u32 %v121, 7
    %v123 = vsub.s32 0, %v122
    %v124 = vrot.slane %v119, %v123
    %126 = vmatprep.subr.mxu0 0.0
    %127 = vmatpush1.msra.mxu0 %v118
    %128 = vmatprep.subr.mxu0 0.0
    %129 = vmatpush1.msra.mxu0 %v117
    %130 = vmatprep.subr.mxu0 0.0
    %131 = vmatpush1.msra.mxu0 %v116
    %132 = vmatprep.subr.mxu0 0.0
    %133 = vmatpush1.msra.mxu0 %v115
    %134 = vmatprep.subr.mxu0 0.0
    %135 = vmatpush1.msra.mxu0 %v114
    %136 = vmatprep.subr.mxu0 0.0
    %137 = vmatpush1.msra.mxu0 %v113
    %138 = vmatprep.subr.mxu0 0.0
    %139 = vmatpush1.msra.mxu0 %v112
    %140 = vmatprep.subr.mxu0 0.0
    %141 = vmatpush1.msra.mxu0 %v111
    %142 = vmatprep.subr.mxu0 0.0
    %143 = vmatpush1.msra.mxu0 %v110
    %144 = vmatprep.subr.mxu0 0.0
    %145 = vmatpush1.msra.mxu0 %v109
    %146 = vmatprep.subr.mxu0 0.0
    %147 = vmatpush1.msra.mxu0 %v108
    %148 = vmatprep.subr.mxu0 0.0
    %149 = vmatpush1.msra.mxu0 %v107
    %150 = vmatprep.subr.mxu0 0.0
    %151 = vmatpush1.msra.mxu0 %v106
    %152 = vmatprep.subr.mxu0 0.0
    %153 = vmatpush1.msra.mxu0 %v105
    %154 = vmatprep.subr.mxu0 0.0
    %155 = vmatpush1.msra.mxu0 %v104
    %156 = vmatprep.subr.mxu0 0.0
    %157 = vmatpush1.msra.mxu0 %v103
    %158 = vmatprep.subr.mxu0 0.0
    %159 = vmatpush2.msra.mxu0 0.0
    %160 = vmatprep.subr.mxu0 0.0
    %161 = vmatpush2.msra.mxu0 0.0
    %162 = vmatprep.subr.mxu0 0.0
    %163 = vmatpush2.msra.mxu0 0.0
    %164 = vmatprep.subr.mxu0 0.0
    %165 = vmatpush2.msra.mxu0 0.0
    %166 = vmatprep.subr.mxu0 0.0
    %167 = vmatpush2.msra.mxu0 0.0
    %168 = vmatprep.subr.mxu0 0.0
    %169 = vmatpush2.msra.mxu0 0.0
    %170 = vmatprep.subr.mxu0 0.0
    %171 = vmatpush2.msra.mxu0 0.0
    %172 = vmatprep.subr.mxu0 0.0
    %173 = vmatpush2.msra.mxu0 0.0
    %174 = vmatprep.subr.mxu0 0.0
    %175 = vmatpush2.msra.mxu0 0.0
    %176 = vmatprep.subr.mxu0 0.0
    %177 = vmatpush2.msra.mxu0 0.0
    %178 = vmatprep.subr.mxu0 0.0
    %179 = vmatpush2.msra.mxu0 0.0
    %180 = vmatprep.subr.mxu0 0.0
    %181 = vmatpush2.msra.mxu0 0.0
    %182 = vmatprep.subr.mxu0 0.0
    %183 = vmatpush2.msra.mxu0 0.0
    %184 = vmatprep.subr.mxu0 0.0
    %185 = vmatpush2.msra.mxu0 0.0
    %186 = vmatprep.subr.mxu0 0.0
    %187 = vmatpush2.msra.mxu0 0.0
    %188 = vmatprep.subr.mxu0 0.0
    %189 = vmatpush2.msra.mxu0 0.0
    %190 = vmatprep.mubr.f32.mxu0 0.0
    %191 = vmatmul.mubr.f32.gmra.mxu0 %v101
    %v192 = vpop.f32.mrf.mxu0
    %v193 = vadd.f32 %v124, %v192
    %v194 = vpop.f32.mrf.mxu0
    %195 = vmatprep.mubr.f32.mxu0 0.0
    %196 = vmatmul.mubr.f32.gmra.mxu0 %v102
    %v197 = vpop.f32.mrf.mxu0
    %v198 = vadd.f32 %v124, %v197
    %v199 = vpop.f32.mrf.mxu0
    %200 = vdwg.mxu0
    %v201 = vmax.f32 %v193, 0.0
    %v202 = vmax.f32 %v198, 0.0
    %v203 = vld [vmem:[%s4] sm:$0xff]
    %v204 = vld [vmem:[%s4 + $0x8] sm:$0xff]
    %v205 = vld [vmem:[%s4 + $0x10] sm:$0xff]
    %v206 = vld [vmem:[%s4 + $0x18] sm:$0xff]
    %v207 = vld [vmem:[%s4 + $0x20] sm:$0xff]
    %v208 = vld [vmem:[%s4 + $0x28] sm:$0xff]
    %v209 = vld [vmem:[%s4 + $0x30] sm:$0xff]
    %v210 = vld [vmem:[%s4 + $0x38] sm:$0xff]
    %v211 = vld [vmem:[%s4 + $0x40] sm:$0xff]
    %v212 = vld [vmem:[%s4 + $0x48] sm:$0xff]
    %v213 = vld [vmem:[%s4 + $0x50] sm:$0xff]
    %v214 = vld [vmem:[%s4 + $0x58] sm:$0xff]
    %v215 = vld [vmem:[%s4 + $0x60] sm:$0xff]
    %v216 = vld [vmem:[%s4 + $0x68] sm:$0xff]
    %v217 = vld [vmem:[%s4 + $0x70] sm:$0xff]
    %v218 = vld [vmem:[%s4 + $0x78] sm:$0xff]
    %v219 = vld [vmem:[%s5] sm:$0x1]
    %v221 = vlaneseq
    %v222 = vshrl.u32 %v221, 7
    %v223 = vsub.s32 0, %v222
    %v224 = vrot.slane %v219, %v223
    %226 = vmatprep.subr.mxu0 0.0
    %227 = vmatpush1.msra.mxu0 %v218
    %228 = vmatprep.subr.mxu0 0.0
    %229 = vmatpush1.msra.mxu0 %v217
    %230 = vmatprep.subr.mxu0 0.0
    %231 = vmatpush1.msra.mxu0 %v216
    %232 = vmatprep.subr.mxu0 0.0
    %233 = vmatpush1.msra.mxu0 %v215
    %234 = vmatprep.subr.mxu0 0.0
    %235 = vmatpush1.msra.mxu0 %v214
    %236 = vmatprep.subr.mxu0 0.0
    %237 = vmatpush1.msra.mxu0 %v213
    %238 = vmatprep.subr.mxu0 0.0
    %239 = vmatpush1.msra.mxu0 %v212
    %240 = vmatprep.subr.mxu0 0.0
    %241 = vmatpush1.msra.mxu0 %v211
    %242 = vmatprep.subr.mxu0 0.0
    %243 = vmatpush1.msra.mxu0 %v210
    %244 = vmatprep.subr.mxu0 0.0
    %245 = vmatpush1.msra.mxu0 %v209
    %246 = vmatprep.subr.mxu0 0.0
    %247 = vmatpush1.msra.mxu0 %v208
    %248 = vmatprep.subr.mxu0 0.0
    %249 = vmatpush1.msra.mxu0 %v207
    %250 = vmatprep.subr.mxu0 0.0
    %251 = vmatpush1.msra.mxu0 %v206
    %252 = vmatprep.subr.mxu0 0.0
    %253 = vmatpush1.msra.mxu0 %v205
    %254 = vmatprep.subr.mxu0 0.0
    %255 = vmatpush1.msra.mxu0 %v204
    %256 = vmatprep.subr.mxu0 0.0
    %257 = vmatpush1.msra.mxu0 %v203
    %258 = vmatprep.subr.mxu0 0.0
    %259 = vmatpush2.msra.mxu0 0.0
    %260 = vmatprep.subr.mxu0 0.0
    %261 = vmatpush2.msra.mxu0 0.0
    %262 = vmatprep.subr.mxu0 0.0
    %263 = vmatpush2.msra.mxu0 0.0
    %264 = vmatprep.subr.mxu0 0.0
    %265 = vmatpush2.msra.mxu0 0.0
    %266 = vmatprep.subr.mxu0 0.0
    %267 = vmatpush2.msra.mxu0 0.0
    %268 = vmatprep.subr.mxu0 0.0
    %269 = vmatpush2.msra.mxu0 0.0
    %270 = vmatprep.subr.mxu0 0.0
    %271 = vmatpush2.msra.mxu0 0.0
    %272 = vmatprep.subr.mxu0 0.0
    %273 = vmatpush2.msra.mxu0 0.0
    %274 = vmatprep.subr.mxu0 0.0
    %275 = vmatpush2.msra.mxu0 0.0
    %276 = vmatprep.subr.mxu0 0.0
    %277 = vmatpush2.msra.mxu0 0.0
    %278 = vmatprep.subr.mxu0 0.0
    %279 = vmatpush2.msra.mxu0 0.0
    %280 = vmatprep.subr.mxu0 0.0
    %281 = vmatpush2.msra.mxu0 0.0
    %282 = vmatprep.subr.mxu0 0.0
    %283 = vmatpush2.msra.mxu0 0.0
    %284 = vmatprep.subr.mxu0 0.0
    %285 = vmatpush2.msra.mxu0 0.0
    %286 = vmatprep.subr.mxu0 0.0
    %287 = vmatpush2.msra.mxu0 0.0
    %288 = vmatprep.subr.mxu0 0.0
    %289 = vmatpush2.msra.mxu0 0.0
    %290 = vmatprep.mubr.f32.mxu0 0.0
    %291 = vmatmul.mubr.f32.gmra.mxu0 %v201
    %v292 = vpop.f32.mrf.mxu0
    %v293 = vadd.f32 %v224, %v292
    %v294 = vpop.f32.mrf.mxu0
    %295 = vmatprep.mubr.f32.mxu0 0.0
    %296 = vmatmul.mubr.f32.gmra.mxu0 %v202
    %v297 = vpop.f32.mrf.mxu0
    %v298 = vadd.f32 %v224, %v297
    %v299 = vpop.f32.mrf.mxu0
    %300 = vdwg.mxu0
    %v301 = vld [vmem:[#allocation3] sm:$0xff]
    %v302 = vld [vmem:[#allocation3 + $0x8] sm:$0xff]
    %v303 = vld [vmem:[#allocation7] sm:$0xff]
    %v304 = vld [vmem:[#allocation7 + $0x8] sm:$0xff]
    %v305 = vld [vmem:[#allocation7 + $0x10] sm:$0xff]
    %v306 = vld [vmem:[%s7] sm:$0xff]
    %v307 = vld [vmem:[%s7 + $0x8] sm:$0xff]
    %v308 = vld [vmem:[%s7 + $0x10] sm:$0xff]
    %v309 = vld [vmem:[%s7 + $0x18] sm:$0xff]
    %vm310 = vcmask 261120
    %v312 = vsel %vm310, %v293, 0
    %v315 = vsel %vm310, %v298, 0
    %317 = vmatprep.subr.mxu0 0.0
    %318 = vmatpush1.msra.mxu0 0.0
    %319 = vmatprep.subr.mxu0 0.0
    %320 = vmatpush1.msra.mxu0 0.0
    %321 = vmatprep.subr.mxu0 0.0
    %322 = vmatpush1.msra.mxu0 0.0
    %323 = vmatprep.subr.mxu0 0.0
    %324 = vmatpush1.msra.mxu0 0.0
    %325 = vmatprep.subr.mxu0 0.0
    %326 = vmatpush1.msra.mxu0 0.0
    %327 = vmatprep.subr.mxu0 0.0
    %328 = vmatpush1.msra.mxu0 0.0
    %329 = vmatprep.subr.mxu0 0.0
    %330 = vmatpush1.msra.mxu0 0.0
    %331 = vmatprep.subr.mxu0 0.0
    %332 = vmatpush1.msra.mxu0 0.0
    %333 = vmatprep.subr.mxu0 0.0
    %334 = vmatpush1.msra.mxu0 0.0
    %335 = vmatprep.subr.mxu0 0.0
    %336 = vmatpush1.msra.mxu0 0.0
    %337 = vmatprep.subr.mxu0 0.0
    %338 = vmatpush1.msra.mxu0 0.0
    %339 = vmatprep.subr.mxu0 0.0
    %340 = vmatpush1.msra.mxu0 0.0
    %341 = vmatprep.subr.mxu0 0.0
    %342 = vmatpush1.msra.mxu0 %v309
    %343 = vmatprep.subr.mxu0 0.0
    %344 = vmatpush1.msra.mxu0 %v308
    %345 = vmatprep.subr.mxu0 0.0
    %346 = vmatpush1.msra.mxu0 %v307
    %347 = vmatprep.subr.mxu0 0.0
    %348 = vmatpush1.msra.mxu0 %v306
    %349 = vmatprep.subr.mxu0 0.0
    %350 = vmatpush2.msra.mxu0 0.0
    %351 = vmatprep.subr.mxu0 0.0
    %352 = vmatpush2.msra.mxu0 0.0
    %353 = vmatprep.subr.mxu0 0.0
    %354 = vmatpush2.msra.mxu0 0.0
    %355 = vmatprep.subr.mxu0 0.0
    %356 = vmatpush2.msra.mxu0 0.0
    %357 = vmatprep.subr.mxu0 0.0
    %358 = vmatpush2.msra.mxu0 0.0
    %359 = vmatprep.subr.mxu0 0.0
    %360 = vmatpush2.msra.mxu0 0.0
    %361 = vmatprep.subr.mxu0 0.0
    %362 = vmatpush2.msra.mxu0 0.0
    %363 = vmatprep.subr.mxu0 0.0
    %364 = vmatpush2.msra.mxu0 0.0
    %365 = vmatprep.subr.mxu0 0.0
    %366 = vmatpush2.msra.mxu0 0.0
    %367 = vmatprep.subr.mxu0 0.0
    %368 = vmatpush2.msra.mxu0 0.0
    %369 = vmatprep.subr.mxu0 0.0
    %370 = vmatpush2.msra.mxu0 0.0
    %371 = vmatprep.subr.mxu0 0.0
    %372 = vmatpush2.msra.mxu0 0.0
    %373 = vmatprep.subr.mxu0 0.0
    %374 = vmatpush2.msra.mxu0 0.0
    %375 = vmatprep.subr.mxu0 0.0
    %376 = vmatpush2.msra.mxu0 0.0
    %377 = vmatprep.subr.mxu0 0.0
    %378 = vmatpush2.msra.mxu0 0.0
    %379 = vmatprep.subr.mxu0 0.0
    %380 = vmatpush2.msra.mxu0 0.0
    %381 = vmatprep.mubr.f32.mxu0 0.0
    %382 = vmatmul.mubr.f32.gmra.mxu0 %v312
    %v383 = vpop.f32.mrf.mxu0
    %v384 = vadd.f32 0.0, %v383
    %v385 = vpop.f32.mrf.mxu0
    %386 = vmatprep.mubr.f32.mxu0 0.0
    %387 = vmatmul.mubr.f32.gmra.mxu0 %v315
    %v388 = vpop.f32.mrf.mxu0
    %v389 = vadd.f32 0.0, %v388
    %v390 = vpop.f32.mrf.mxu0
    %391 = vdwg.mxu0
    %vm392 = vcmask 195584
    %v394 = vsel %vm392, %v301, 0
    %v397 = vsel %vm392, %v302, 0
    %399 = vmatprep.subr.mxu0 0.0
    %400 = vmatpush1.msra.mxu0 0.0
    %401 = vmatprep.subr.mxu0 0.0
    %402 = vmatpush1.msra.mxu0 0.0
    %403 = vmatprep.subr.mxu0 0.0
    %404 = vmatpush1.msra.mxu0 0.0
    %405 = vmatprep.subr.mxu0 0.0
    %406 = vmatpush1.msra.mxu0 0.0
    %407 = vmatprep.subr.mxu0 0.0
    %408 = vmatpush1.msra.mxu0 0.0
    %409 = vmatprep.subr.mxu0 0.0
    %410 = vmatpush1.msra.mxu0 0.0
    %411 = vmatprep.subr.mxu0 0.0
    %412 = vmatpush1.msra.mxu0 0.0
    %413 = vmatprep.subr.mxu0 0.0
    %414 = vmatpush1.msra.mxu0 0.0
    %415 = vmatprep.subr.mxu0 0.0
    %416 = vmatpush1.msra.mxu0 0.0
    %417 = vmatprep.subr.mxu0 0.0
    %418 = vmatpush1.msra.mxu0 0.0
    %419 = vmatprep.subr.mxu0 0.0
    %420 = vmatpush1.msra.mxu0 0.0
    %421 = vmatprep.subr.mxu0 0.0
    %422 = vmatpush1.msra.mxu0 0.0
    %423 = vmatprep.subr.mxu0 0.0
    %424 = vmatpush1.msra.mxu0 0.0
    %425 = vmatprep.subr.mxu0 0.0
    %426 = vmatpush1.msra.mxu0 %v305
    %427 = vmatprep.subr.mxu0 0.0
    %428 = vmatpush1.msra.mxu0 %v304
    %429 = vmatprep.subr.mxu0 0.0
    %430 = vmatpush1.msra.mxu0 %v303
    %431 = vmatprep.subr.mxu0 0.0
    %432 = vmatpush2.msra.mxu0 0.0
    %433 = vmatprep.subr.mxu0 0.0
    %434 = vmatpush2.msra.mxu0 0.0
    %435 = vmatprep.subr.mxu0 0.0
    %436 = vmatpush2.msra.mxu0 0.0
    %437 = vmatprep.subr.mxu0 0.0
    %438 = vmatpush2.msra.mxu0 0.0
    %439 = vmatprep.subr.mxu0 0.0
    %440 = vmatpush2.msra.mxu0 0.0
    %441 = vmatprep.subr.mxu0 0.0
    %442 = vmatpush2.msra.mxu0 0.0
    %443 = vmatprep.subr.mxu0 0.0
    %444 = vmatpush2.msra.mxu0 0.0
    %445 = vmatprep.subr.mxu0 0.0
    %446 = vmatpush2.msra.mxu0 0.0
    %447 = vmatprep.subr.mxu0 0.0
    %448 = vmatpush2.msra.mxu0 0.0
    %449 = vmatprep.subr.mxu0 0.0
    %450 = vmatpush2.msra.mxu0 0.0
    %451 = vmatprep.subr.mxu0 0.0
    %452 = vmatpush2.msra.mxu0 0.0
    %453 = vmatprep.subr.mxu0 0.0
    %454 = vmatpush2.msra.mxu0 0.0
    %455 = vmatprep.subr.mxu0 0.0
    %456 = vmatpush2.msra.mxu0 0.0
    %457 = vmatprep.subr.mxu0 0.0
    %458 = vmatpush2.msra.mxu0 0.0
    %459 = vmatprep.subr.mxu0 0.0
    %460 = vmatpush2.msra.mxu0 0.0
    %461 = vmatprep.subr.mxu0 0.0
    %462 = vmatpush2.msra.mxu0 0.0
    %463 = vmatprep.mubr.f32.mxu0 0.0
    %464 = vmatmul.mubr.f32.gmra.mxu0 %v394
    %v465 = vpop.f32.mrf.mxu0
    %v466 = vadd.f32 %v384, %v465
    %v467 = vpop.f32.mrf.mxu0
    %468 = vmatprep.mubr.f32.mxu0 0.0
    %469 = vmatmul.mubr.f32.gmra.mxu0 %v397
    %v470 = vpop.f32.mrf.mxu0
    %v471 = vadd.f32 %v389, %v470
    %v472 = vpop.f32.mrf.mxu0
    %473 = vdwg.mxu0
    %v474 = vld [vmem:[%s8] sm:$0x1]
    %v476 = vlaneseq
    %v477 = vshrl.u32 %v476, 7
    %v478 = vsub.s32 0, %v477
    %v479 = vrot.slane %v474, %v478
    %v481 = vadd.f32 %v466, %v479
    %v482 = vadd.f32 %v471, %v479
    %v483 = vmax.f32 %v481, 0.0
    %v484 = vmax.f32 %v482, 0.0
    %v485 = vld [vmem:[#allocation8] sm:$0xff]
    %v486 = vld [vmem:[#allocation8 + $0x8] sm:$0xff]
    %v487 = vld [vmem:[#allocation8 + $0x10] sm:$0xff]
    %v488 = vld [vmem:[#allocation8 + $0x18] sm:$0xff]
    %v489 = vld [vmem:[#allocation8 + $0x20] sm:$0xff]
    %v490 = vld [vmem:[#allocation8 + $0x28] sm:$0xff]
    %v491 = vld [vmem:[#allocation8 + $0x30] sm:$0xff]
    %v492 = vld [vmem:[#allocation8 + $0x38] sm:$0xff]
    %v493 = vld [vmem:[%s10] sm:$0x1]
    %v495 = vlaneseq
    %v496 = vshrl.u32 %v495, 7
    %v497 = vsub.s32 0, %v496
    %v498 = vrot.slane %v493, %v497
    %vm500 = vcmask 523264
    %v502 = vsel %vm500, %v483, 0
    %v505 = vsel %vm500, %v484, 0
    %507 = vmatprep.subr.mxu0 0.0
    %508 = vmatpush1.msra.mxu0 0.0
    %509 = vmatprep.subr.mxu0 0.0
    %510 = vmatpush1.msra.mxu0 0.0
    %511 = vmatprep.subr.mxu0 0.0
    %512 = vmatpush1.msra.mxu0 0.0
    %513 = vmatprep.subr.mxu0 0.0
    %514 = vmatpush1.msra.mxu0 0.0
    %515 = vmatprep.subr.mxu0 0.0
    %516 = vmatpush1.msra.mxu0 0.0
    %517 = vmatprep.subr.mxu0 0.0
    %518 = vmatpush1.msra.mxu0 0.0
    %519 = vmatprep.subr.mxu0 0.0
    %520 = vmatpush1.msra.mxu0 0.0
    %521 = vmatprep.subr.mxu0 0.0
    %522 = vmatpush1.msra.mxu0 0.0
    %523 = vmatprep.subr.mxu0 0.0
    %524 = vmatpush1.msra.mxu0 %v492
    %525 = vmatprep.subr.mxu0 0.0
    %526 = vmatpush1.msra.mxu0 %v491
    %527 = vmatprep.subr.mxu0 0.0
    %528 = vmatpush1.msra.mxu0 %v490
    %529 = vmatprep.subr.mxu0 0.0
    %530 = vmatpush1.msra.mxu0 %v489
    %531 = vmatprep.subr.mxu0 0.0
    %532 = vmatpush1.msra.mxu0 %v488
    %533 = vmatprep.subr.mxu0 0.0
    %534 = vmatpush1.msra.mxu0 %v487
    %535 = vmatprep.subr.mxu0 0.0
    %536 = vmatpush1.msra.mxu0 %v486
    %537 = vmatprep.subr.mxu0 0.0
    %538 = vmatpush1.msra.mxu0 %v485
    %539 = vmatprep.subr.mxu0 0.0
    %540 = vmatpush2.msra.mxu0 0.0
    %541 = vmatprep.subr.mxu0 0.0
    %542 = vmatpush2.msra.mxu0 0.0
    %543 = vmatprep.subr.mxu0 0.0
    %544 = vmatpush2.msra.mxu0 0.0
    %545 = vmatprep.subr.mxu0 0.0
    %546 = vmatpush2.msra.mxu0 0.0
    %547 = vmatprep.subr.mxu0 0.0
    %548 = vmatpush2.msra.mxu0 0.0
    %549 = vmatprep.subr.mxu0 0.0
    %550 = vmatpush2.msra.mxu0 0.0
    %551 = vmatprep.subr.mxu0 0.0
    %552 = vmatpush2.msra.mxu0 0.0
    %553 = vmatprep.subr.mxu0 0.0
    %554 = vmatpush2.msra.mxu0 0.0
    %555 = vmatprep.subr.mxu0 0.0
    %556 = vmatpush2.msra.mxu0 0.0
    %557 = vmatprep.subr.mxu0 0.0
    %558 = vmatpush2.msra.mxu0 0.0
    %559 = vmatprep.subr.mxu0 0.0
    %560 = vmatpush2.msra.mxu0 0.0
    %561 = vmatprep.subr.mxu0 0.0
    %562 = vmatpush2.msra.mxu0 0.0
    %563 = vmatprep.subr.mxu0 0.0
    %564 = vmatpush2.msra.mxu0 0.0
    %565 = vmatprep.subr.mxu0 0.0
    %566 = vmatpush2.msra.mxu0 0.0
    %567 = vmatprep.subr.mxu0 0.0
    %568 = vmatpush2.msra.mxu0 0.0
    %569 = vmatprep.subr.mxu0 0.0
    %570 = vmatpush2.msra.mxu0 0.0
    %571 = vmatprep.mubr.f32.mxu0 0.0
    %572 = vmatmul.mubr.f32.gmra.mxu0 %v502
    %v573 = vpop.f32.mrf.mxu0
    %v574 = vadd.f32 %v498, %v573
    %v575 = vpop.f32.mrf.mxu0
    %576 = vmatprep.mubr.f32.mxu0 0.0
    %577 = vmatmul.mubr.f32.gmra.mxu0 %v505
    %v578 = vpop.f32.mrf.mxu0
    %v579 = vadd.f32 %v498, %v578
    %v580 = vpop.f32.mrf.mxu0
    %581 = vdwg.mxu0
    %v582 = vmax.f32 %v574, 0.0
    %v583 = vmax.f32 %v579, 0.0
    %v584 = vld [vmem:[%s11] sm:$0x1]
    %v586 = vlaneseq
    %v587 = vshrl.u32 %v586, 7
    %v588 = vsub.s32 0, %v587
    %v589 = vrot.slane %v584, %v588
    %v591 = vmul.f32 %v582, %v589
    %v592 = vmul.f32 %v583, %v589
    %v593 = vsel %vm500, %v591, 0.0
    %594 = vadd.xlane.f32.xlu0 %v593
    %v595 = vpop.xlane.xlu0 %594
    %v596 = vsel %vm500, %v592, 0.0
    %597 = vadd.xlane.f32.xlu0 %v596
    %v598 = vpop.xlane.xlu0 %597
    %v599 = vld [vmem:[#allocation2] sm:$0x1]
    %v601 = vlaneseq
    %v602 = vshrl.u32 %v601, 7
    %v603 = vsub.s32 0, %v602
    %v604 = vrot.slane %v599, %v603
    %v606 = vadd.f32 %v595, %v604
    %v607 = vadd.f32 %v598, %v604
    %vm608 = vcmask 7168
    %609 = vst.msk [vmem:[%s13] sm:$0xff] %vm608, %v606
    %610 = vst.msk [vmem:[%s13 + $0x8] sm:$0xff] %vm608, %v607
    // Predicated region
    $region70: #{tpu_custom_call.1} parent=1 // pred_check
      _
    $region71: #{tpu_custom_call.1} parent=1 // pred_check_branch
      %612 = sbr.rel (0) target = $region73
    $region72: #{tpu_custom_call.1} parent=1 // pred_region
      _
    $region73: #{tpu_custom_call.1} parent=1 // pred_fallthru
      _
    // Predicated region
    $region74: #{tpu_custom_call.1} parent=1 // pred_check
      _
    $region75: #{tpu_custom_call.1} parent=1 // pred_check_branch
      %614 = sbr.rel (0) target = $region77
    $region76: #{tpu_custom_call.1} parent=1 // pred_region
      _
    $region77: #{tpu_custom_call.1} parent=1 // pred_fallthru
      _
    %615 = vsyncpa [#allocation4], 1
    %616 = vsyncpa [#allocation6], 1
    %617 = vsyncpa [#allocation9], 1

</llo_original>
